<compile_context>
chip_gen: v5e
topology: v5e:2x2
jax: 0.10.0
libtpu: 0.0.40
codegen_flags: <defaults>
</compile_context>

<pallas_src>
import functools
import math

import jax
import jax.numpy as jnp
from jax import lax
from jax.experimental import pallas as pl
from jax.experimental.pallas import tpu as pltpu


def _round_up(x: int, m: int) -> int:
    return ((x + m - 1) // m) * m


def _select_tiling():
    """Per-generation VMEM budget + default token tile (v7x has half the VMEM)."""
    vmem_cap = 128 * 1024 * 1024
    try:
        info = pltpu.get_tpu_info()
        vmem_cap = int(getattr(info, "vmem_capacity_bytes", vmem_cap))
    except Exception:
        pass
    if vmem_cap <= 64 * 1024 * 1024:          # v7x-class: halved VMEM
        return 36 * 1024 * 1024, 256
    return 64 * 1024 * 1024, 512              # v5e / v6e (128 MiB VMEM)


# ---------------------------------------------------------------------------
# Kernel 1: fused Q/K/V projection  (one (H, 3H) weight, tiled over tokens)
# ---------------------------------------------------------------------------
def _qkv_kernel(x_ref, w_ref, b_ref, q_ref, k_ref, v_ref, *, hidden):
    # Matmul in the operands' native dtype (bf16 hits the bf16 MXU); f32 accum.
    acc = jnp.dot(x_ref[...], w_ref[...], preferred_element_type=jnp.float32)
    acc = acc + b_ref[...].astype(jnp.float32)
    q_ref[...] = acc[:, :hidden].astype(q_ref.dtype)
    k_ref[...] = acc[:, hidden:2 * hidden].astype(k_ref.dtype)
    v_ref[...] = acc[:, 2 * hidden:].astype(v_ref.dtype)


def qkv_projection(x2, wqkv, bqkv, *, tile_m, vmem_limit):
    T, H = x2.shape
    grid = (T // tile_m,)
    tok_spec = pl.BlockSpec((tile_m, H), lambda i: (i, 0))
    out_sds = jax.ShapeDtypeStruct((T, H), x2.dtype)
    isz = x2.dtype.itemsize
    return pl.pallas_call(
        functools.partial(_qkv_kernel, hidden=H),
        out_shape=(out_sds, out_sds, out_sds),
        grid_spec=pl.GridSpec(
            grid=grid,
            in_specs=[tok_spec,
                      pl.BlockSpec((H, 3 * H), lambda i: (0, 0)),   # resident weight
                      pl.BlockSpec((1, 3 * H), lambda i: (0, 0))],
            out_specs=(tok_spec, tok_spec, tok_spec)),
        compiler_params=pltpu.CompilerParams(
            dimension_semantics=("parallel",),
            vmem_limit_bytes=vmem_limit),
        cost_estimate=pl.CostEstimate(
            flops=2 * T * H * 3 * H,
            transcendentals=0,
            bytes_accessed=(4 * T * H + 3 * H * H + 3 * H) * isz),
    )(x2, wqkv, bqkv)


# ---------------------------------------------------------------------------
# Kernel 2: attention core, one batch element (ALL heads) per grid step.
#   softmax( Q K^T + mask ) V   with scale pre-folded into Q.
# ---------------------------------------------------------------------------
def _attention_core_kernel(q_ref, k_ref, v_ref, mask_ref, o_ref, *,
                           num_heads, head_dim, approx_recip):
    q = q_ref[0]                                # (S, H) native dtype (pre-scaled)
    k = k_ref[0]
    v = v_ref[0]
    mask = mask_ref[0].astype(jnp.float32)      # (1, S) additive key mask

    ctx_heads = []
    for h in range(num_heads):                  # static unroll over heads
        lo = h * head_dim
        qh = q[:, lo:lo + head_dim]
        kh = k[:, lo:lo + head_dim]
        vh = v[:, lo:lo + head_dim]

        # scores[s, t] = sum_d qh[s, d] * kh[t, d]  (contract hd, no transpose)
        scores = lax.dot_general(qh, kh, (((1,), (1,)), ((), ())),
                                 preferred_element_type=jnp.float32)
        scores = scores + mask

        # numerically stable softmax, normalization deferred past the PV matmul
        m = jnp.max(scores, axis=-1, keepdims=True)
        p = jnp.exp(scores - m)
        denom = jnp.sum(p, axis=-1, keepdims=True)
        # TODO(synk): training-mode attention-probs dropout / head_mask not implemented.
        ctx = jnp.dot(p.astype(vh.dtype), vh, preferred_element_type=jnp.float32)
        if approx_recip:
            inv = pl.reciprocal(denom, approx=True)   # EUP slot, ~free
        else:
            inv = 1.0 / denom                         # exact (f32 path)
        ctx_heads.append(ctx * inv)

    # single lane-dense (S, H) store, heads contiguous along the last dim
    o_ref[0] = jnp.concatenate(ctx_heads, axis=-1).astype(o_ref.dtype)
    # TODO(synk): for S >= 1024 switch to a KV-tiled (flash-style) online softmax
    # to bound the (S, S) f32 temporaries.


def attention_core(q3, k3, v3, mask3, *, num_heads, approx_recip, vmem_limit):
    B, S, H = q3.shape
    hd = H // num_heads
    qkv_spec = pl.BlockSpec((1, S, H), lambda b: (b, 0, 0))
    mask_spec = pl.BlockSpec((1, 1, S), lambda b: (b, 0, 0))
    isz = q3.dtype.itemsize
    return pl.pallas_call(
        functools.partial(_attention_core_kernel, num_heads=num_heads,
                          head_dim=hd, approx_recip=approx_recip),
        out_shape=jax.ShapeDtypeStruct((B, S, H), q3.dtype),
        grid_spec=pl.GridSpec(
            grid=(B,),
            in_specs=[qkv_spec, qkv_spec, qkv_spec, mask_spec],
            out_specs=qkv_spec),
        compiler_params=pltpu.CompilerParams(
            dimension_semantics=("parallel",),
            vmem_limit_bytes=vmem_limit),
        cost_estimate=pl.CostEstimate(
            flops=4 * B * num_heads * S * S * hd,
            transcendentals=B * num_heads * S * (S + 1),
            bytes_accessed=(4 * B * S * H + B * S) * isz),
    )(q3, k3, v3, mask3)


# ---------------------------------------------------------------------------
# Kernel 3: BertSelfOutput = dense + residual + LayerNorm (f32 epilogue)
# ---------------------------------------------------------------------------
def _self_output_kernel(x_ref, res_ref, w_ref, b_ref, g_ref, beta_ref, o_ref,
                        *, eps: float):
    h = jnp.dot(x_ref[...], w_ref[...], preferred_element_type=jnp.float32)
    h = h + b_ref[...].astype(jnp.float32) + res_ref[...].astype(jnp.float32)
    # TODO(synk): training-mode hidden dropout not implemented (eval => identity).

    mean = jnp.mean(h, axis=-1, keepdims=True)
    c = h - mean
    var = jnp.mean(c * c, axis=-1, keepdims=True)
    out = c * lax.rsqrt(var + eps)
    out = out * g_ref[...].astype(jnp.float32) + beta_ref[...].astype(jnp.float32)
    o_ref[...] = out.astype(o_ref.dtype)


def bert_self_output(x2, r2, w, b, gamma, beta, *, eps, tile_m, vmem_limit):
    T, H = x2.shape
    grid = (T // tile_m,)
    tok_spec = pl.BlockSpec((tile_m, H), lambda i: (i, 0))
    vec_spec = pl.BlockSpec((1, H), lambda i: (0, 0))
    isz = x2.dtype.itemsize
    return pl.pallas_call(
        functools.partial(_self_output_kernel, eps=eps),
        out_shape=jax.ShapeDtypeStruct((T, H), x2.dtype),
        grid_spec=pl.GridSpec(
            grid=grid,
            in_specs=[tok_spec, tok_spec,
                      pl.BlockSpec((H, H), lambda i: (0, 0)),
                      vec_spec, vec_spec, vec_spec],
            out_specs=tok_spec),
        compiler_params=pltpu.CompilerParams(
            dimension_semantics=("parallel",),
            vmem_limit_bytes=vmem_limit),
        cost_estimate=pl.CostEstimate(
            flops=2 * T * H * H + 8 * T * H,
            transcendentals=T,
            bytes_accessed=(3 * T * H + H * H + 4 * H) * isz),
    )(x2, r2, w, b.reshape(1, H), gamma.reshape(1, H), beta.reshape(1, H))


# ---------------------------------------------------------------------------
# Full BertAttention forward (absolute position embeddings, self-attention only)
# ---------------------------------------------------------------------------
def bert_attention(hidden_states, attention_mask, params, *, num_heads,
                   eps=1e-12, tile_m=None, approx_recip=None):
    """hidden_states: [B, S, H]; attention_mask: additive [B, S] (0 keep / -1e4 mask) or None.
    params: dict with wq,bq,wk,bk,wv,bv,wo,bo (weights as (in, out)), gamma, beta.
    For best perf pass bf16 hidden_states/params (f32 accumulation is kept internally)."""
    B, S, H = hidden_states.shape
    assert H % num_heads == 0, "hidden size must be a multiple of num_heads"
    hd = H // num_heads
    T = B * S
    dt = hidden_states.dtype

    vmem_limit, default_tile = _select_tiling()
    if tile_m is None:
        tile_m = default_tile
    tile_m = max(8, min(tile_m, _round_up(T, 8)))
    T_pad = _round_up(T, tile_m)
    if approx_recip is None:
        approx_recip = dt == jnp.bfloat16

    # Fold the 1/sqrt(hd) softmax scale into the query projection and fuse QKV
    # weights into a single (H, 3H) matrix (one long-N MXU pass per token tile).
    scale = 1.0 / math.sqrt(hd)
    wqkv = jnp.concatenate(
        [params["wq"] * scale, params["wk"], params["wv"]], axis=1).astype(dt)
    bqkv = jnp.concatenate(
        [params["bq"] * scale, params["bk"], params["bv"]]).reshape(1, 3 * H).astype(dt)

    x2 = hidden_states.reshape(T, H)
    x2p = jnp.pad(x2, ((0, T_pad - T), (0, 0))) if T_pad != T else x2

    # --- fused Q/K/V projections ---
    q2, k2, v2 = qkv_projection(x2p, wqkv, bqkv, tile_m=tile_m, vmem_limit=vmem_limit)

    def unflat(t2):  # token-major (B, S, H); pure reshape, no transpose / HBM shuffle
        t2 = t2[:T] if T_pad != T else t2
        return t2.reshape(B, S, H)

    q3, k3, v3 = unflat(q2), unflat(k2), unflat(v2)

    if attention_mask is None:
        mask3 = jnp.zeros((B, 1, S), dtype=dt)
    else:
        mask3 = attention_mask.reshape(B, 1, S).astype(dt)

    # --- attention core (all heads per batch element, lane-dense (S, H) output) ---
    ctx3 = attention_core(q3, k3, v3, mask3, num_heads=num_heads,
                          approx_recip=approx_recip, vmem_limit=vmem_limit)
    ctx2 = ctx3.reshape(T, H)
    ctx2p = jnp.pad(ctx2, ((0, T_pad - T), (0, 0))) if T_pad != T else ctx2

    # --- output dense + residual + LayerNorm ---
    out2 = bert_self_output(ctx2p, x2p,
                            params["wo"].astype(dt), params["bo"].astype(dt),
                            params["gamma"].astype(dt), params["beta"].astype(dt),
                            eps=eps, tile_m=tile_m, vmem_limit=vmem_limit)
    return out2[:T].reshape(B, S, H)
    # TODO(synk): relative_key(_query) position embeddings, cross-attention /
    # past_key_value cache, head_mask and head pruning are not implemented.


# ---------------------------------------------------------------------------
# Pure-JAX reference
# ---------------------------------------------------------------------------
def _reference(x, mask, p, *, num_heads, eps):
    B, S, H = x.shape
    hd = H // num_heads
    q = x @ p["wq"] + p["bq"]
    k = x @ p["wk"] + p["bk"]
    v = x @ p["wv"] + p["bv"]

    def split(t):
        return t.reshape(B, S, num_heads, hd).transpose(0, 2, 1, 3)

    qh, kh, vh = split(q), split(k), split(v)
    scores = jnp.einsum("bhqd,bhkd->bhqk", qh, kh) / math.sqrt(hd)
    if mask is not None:
        scores = scores + mask[:, None, None, :]
    probs = jax.nn.softmax(scores, axis=-1)
    ctx = jnp.einsum("bhqk,bhkd->bhqd", probs, vh)
    ctx = ctx.transpose(0, 2, 1, 3).reshape(B, S, H)

    h = ctx @ p["wo"] + p["bo"] + x
    mean = jnp.mean(h, axis=-1, keepdims=True)
    var = jnp.mean((h - mean) ** 2, axis=-1, keepdims=True)
    return (h - mean) / jnp.sqrt(var + eps) * p["gamma"] + p["beta"]


if __name__ == "__main__":
    batch, seq, hidden, num_heads = 2, 8, 32, 4
    eps = 1e-12

    key = jax.random.PRNGKey(0)
    ks = jax.random.split(key, 6)

    hidden_states = jax.random.normal(ks[0], (batch, seq, hidden), dtype=jnp.float32)
    # Additive attention mask (0 = keep, -1e4 = masked): mask last two keys of batch 1.
    attention_mask = jnp.zeros((batch, seq), jnp.float32).at[1, -2:].set(-1e4)

    def linear_params(k, fan_in, fan_out):
        kw, kb = jax.random.split(k)
        w = jax.random.normal(kw, (fan_in, fan_out), jnp.float32) / math.sqrt(fan_in)
        b = jax.random.normal(kb, (fan_out,), jnp.float32) * 0.02
        return w, b

    wq, bq = linear_params(ks[1], hidden, hidden)
    wk, bk = linear_params(ks[2], hidden, hidden)
    wv, bv = linear_params(ks[3], hidden, hidden)
    wo, bo = linear_params(ks[4], hidden, hidden)
    params = dict(wq=wq, bq=bq, wk=wk, bk=bk, wv=wv, bv=bv, wo=wo, bo=bo,
                  gamma=jnp.ones((hidden,), jnp.float32),
                  beta=jnp.zeros((hidden,), jnp.float32))

    out = bert_attention(hidden_states, attention_mask, params,
                         num_heads=num_heads, eps=eps)
    out = jax.block_until_ready(out)

    ref = _reference(hidden_states, attention_mask, params,
                     num_heads=num_heads, eps=eps)
    assert out.shape == (batch, seq, hidden)
    assert jnp.allclose(out, ref, atol=5e-4, rtol=5e-4), "mismatch vs reference"

    print("KERNEL_OK")
</pallas_src>

<mosaic_0001>
module attributes {stable_mosaic.version = 11 : i64} {
  func.func @_qkv_kernel(%arg0: i32, %arg1: memref<16x32xf32, #tpu.memory_space<vmem>>, %arg2: memref<32x96xf32, #tpu.memory_space<vmem>>, %arg3: memref<1x96xf32, #tpu.memory_space<vmem>>, %arg4: memref<16x32xf32, #tpu.memory_space<vmem>>, %arg5: memref<16x32xf32, #tpu.memory_space<vmem>>, %arg6: memref<16x32xf32, #tpu.memory_space<vmem>>) attributes {dimension_semantics = [#tpu.dimension_semantics<parallel>], iteration_bounds = array<i64: 1>, scalar_prefetch = 0 : i64, scratch_operands = 0 : i64, tpu.core_type = #tpu.core_type<tc>, window_params = [{transform_indices = @transform_0, window_bounds = array<i64: 16, 32>}, {pipeline_mode = #tpu.pipeline_mode<synchronous>, transform_indices = @transform_1, window_bounds = array<i64: 32, 96>}, {pipeline_mode = #tpu.pipeline_mode<synchronous>, transform_indices = @transform_2, window_bounds = array<i64: 1, 96>}, {transform_indices = @transform_3, window_bounds = array<i64: 16, 32>}, {transform_indices = @transform_4, window_bounds = array<i64: 16, 32>}, {transform_indices = @transform_5, window_bounds = array<i64: 16, 32>}]} {
    %c0 = arith.constant 0 : index
    %c0_0 = arith.constant 0 : index
    %0 = vector.load %arg1[%c0, %c0_0] : memref<16x32xf32, #tpu.memory_space<vmem>>, vector<16x32xf32>
    %c0_1 = arith.constant 0 : index
    %c0_2 = arith.constant 0 : index
    %1 = vector.load %arg2[%c0_1, %c0_2] : memref<32x96xf32, #tpu.memory_space<vmem>>, vector<32x96xf32>
    %cst = arith.constant dense<0.000000e+00> : vector<16x96xf32>
    %2 = tpu.matmul %0, %1, %cst {dimension_numbers = #tpu.dot_dimension_numbers<[1], [0], [0], [1], [0, 0, 1, 1], [], []>} : vector<16x32xf32>, vector<32x96xf32>, vector<16x96xf32> -> vector<16x96xf32>
    %c0_3 = arith.constant 0 : index
    %c0_4 = arith.constant 0 : index
    %3 = vector.load %arg3[%c0_3, %c0_4] : memref<1x96xf32, #tpu.memory_space<vmem>>, vector<1x96xf32>
    %4 = vector.broadcast %3 : vector<1x96xf32> to vector<16x96xf32>
    %5 = arith.addf %2, %4 : vector<16x96xf32>
    %6 = vector.extract_strided_slice %5 {offsets = [0, 0], sizes = [16, 32], strides = [1, 1]} : vector<16x96xf32> to vector<16x32xf32>
    %c0_5 = arith.constant 0 : index
    %c0_6 = arith.constant 0 : index
    %7 = vector.load %arg4[%c0_5, %c0_6] : memref<16x32xf32, #tpu.memory_space<vmem>>, vector<16x32xf32>
    tpu.vector_store %arg4[%c0_5, %c0_6], %6 {strides = array<i32>} : memref<16x32xf32, #tpu.memory_space<vmem>>, vector<16x32xf32>,
    %8 = vector.extract_strided_slice %5 {offsets = [0, 32], sizes = [16, 32], strides = [1, 1]} : vector<16x96xf32> to vector<16x32xf32>
    %c0_7 = arith.constant 0 : index
    %c0_8 = arith.constant 0 : index
    %9 = vector.load %arg5[%c0_7, %c0_8] : memref<16x32xf32, #tpu.memory_space<vmem>>, vector<16x32xf32>
    tpu.vector_store %arg5[%c0_7, %c0_8], %8 {strides = array<i32>} : memref<16x32xf32, #tpu.memory_space<vmem>>, vector<16x32xf32>,
    %10 = vector.extract_strided_slice %5 {offsets = [0, 64], sizes = [16, 32], strides = [1, 1]} : vector<16x96xf32> to vector<16x32xf32>
    %c0_9 = arith.constant 0 : index
    %c0_10 = arith.constant 0 : index
    %11 = vector.load %arg6[%c0_9, %c0_10] : memref<16x32xf32, #tpu.memory_space<vmem>>, vector<16x32xf32>
    tpu.vector_store %arg6[%c0_9, %c0_10], %10 {strides = array<i32>} : memref<16x32xf32, #tpu.memory_space<vmem>>, vector<16x32xf32>,
    return
  }
  func.func @transform_0(%arg0: i32) -> (i32, i32) {
    %c0_i32 = arith.constant 0 : i32
    %c0_i32_0 = arith.constant 0 : i32
    return %arg0, %c0_i32 : i32, i32
  }
  func.func @transform_1(%arg0: i32) -> (i32, i32) {
    %c0_i32 = arith.constant 0 : i32
    %c0_i32_0 = arith.constant 0 : i32
    %c0_i32_1 = arith.constant 0 : i32
    return %c0_i32, %c0_i32_0 : i32, i32
  }
  func.func @transform_2(%arg0: i32) -> (i32, i32) {
    %c0_i32 = arith.constant 0 : i32
    %c0_i32_0 = arith.constant 0 : i32
    %c0_i32_1 = arith.constant 0 : i32
    return %c0_i32, %c0_i32_0 : i32, i32
  }
  func.func @transform_3(%arg0: i32) -> (i32, i32) {
    %c0_i32 = arith.constant 0 : i32
    %c0_i32_0 = arith.constant 0 : i32
    return %arg0, %c0_i32 : i32, i32
  }
  func.func @transform_4(%arg0: i32) -> (i32, i32) {
    %c0_i32 = arith.constant 0 : i32
    %c0_i32_0 = arith.constant 0 : i32
    return %arg0, %c0_i32 : i32, i32
  }
  func.func @transform_5(%arg0: i32) -> (i32, i32) {
    %c0_i32 = arith.constant 0 : i32
    %c0_i32_0 = arith.constant 0 : i32
    return %arg0, %c0_i32 : i32, i32
  }
}

</mosaic_0001>

<llo_original>
// kernel: tpu_custom_call.1
$region0: #{tpu_custom_call.1}
  #allocation0 [shape = 'u32[]', space=smem, size = 0x4, offset = 0x4, fixed_abs, tag = 'smem constant byte address 0x4 - core index']
  #allocation1 [shape = 'u32[72,128]{1,0:T(1,128)}', space=vmem, size = 0x9000, scoped, tag = 'internal scratch']
  %s0 = inlined_call_operand.hbm [shape: f32[16,32], index: 0, kind: input, shape index: {}]
  %s1 = inlined_call_operand.hbm [shape: f32[32,96], index: 1, kind: input, shape index: {}]
  %s2 = inlined_call_operand.vmem [shape: f32[1,96], index: 2, kind: input, shape index: {}]
  %s3 = inlined_call_operand.hbm [shape: f32[16,32], index: 3, kind: output, shape index: {0}]
  %s4 = inlined_call_operand.hbm [shape: f32[16,32], index: 4, kind: output, shape index: {1}]
  %s5 = inlined_call_operand.hbm [shape: f32[16,32], index: 5, kind: output, shape index: {2}]
  %6 = xla_tuple %s3, %s4, %s5
  %s7 = sld [smem:[#allocation0]]
  $region46: #{tpu_custom_call.1} parent=0
    _
  %s9 = ssub.s32 1, %s7
  %s10 = scalar_select 0, %s9, %s7
  $region1: #{tpu_custom_call.1} parent=0
    #allocation2 [shape = 'u8[8192]{0}', space=vmem, size = 0x2000, scoped, tag = 'input window, operand 0, single buffered']
    #allocation3 [shape = 's32[1]{0}', space=sflag, size = 0x4, scoped, tag = 'scoped memory for tpu_custom_call.1']
    #allocation4 [shape = 's32[1]{0}', space=sflag, size = 0x4, scoped, tag = 'scoped memory for tpu_custom_call.1']
    #allocation5 [shape = 'u8[16384]{0}', space=vmem, size = 0x4000, scoped, tag = 'input window, operand 1, single buffered']
    #allocation6 [shape = 's32[1]{0}', space=sflag, size = 0x4, scoped, tag = 'scoped memory for tpu_custom_call.1']
    #allocation7 [shape = 'u8[8192]{0}', space=vmem, size = 0x2000, scoped, tag = 'output window, operand 0, single buffered']
    #allocation8 [shape = 'u8[8192]{0}', space=vmem, size = 0x2000, scoped, tag = 'output window, operand 1, single buffered']
    #allocation9 [shape = 's32[1]{0}', space=sflag, size = 0x4, scoped, tag = 'scoped memory for tpu_custom_call.1']
    #allocation10 [shape = 'u8[8192]{0}', space=vmem, size = 0x2000, scoped, tag = 'output window, operand 2, single buffered']
    %11 = vsyncpa [#allocation3], 0
    %12 = vsyncpa [#allocation6], 0
    %13 = vsyncpa [#allocation4], 0
    %14 = vsyncpa [#allocation9], 0
    // Predicated region
    $region2: #{tpu_custom_call.1} parent=1 // pred_check
      _
    $region3: #{tpu_custom_call.1} parent=1 // pred_check_branch
      %16 = sbr.rel (0) target = $region5
    $region4: #{tpu_custom_call.1} parent=1 // pred_region
      %18 = vsyncadd [#allocation3], 0
      %s19 = sshll.u32 %s0, 4
      %s20 = int_to_ptr.hbm [resolvable:$true] %s19
      %s21 = sshll.u32 [#allocation2], 4
      %s22 = int_to_ptr.vmem [resolvable:$true] %s21
      %27 = dma.hbm_to_vmem [thread:$0]  %s20, 256, %s22, [#allocation3], 128, 128, 8
    $region5: #{tpu_custom_call.1} parent=1 // pred_fallthru
      _
    // Predicated region
    $region6: #{tpu_custom_call.1} parent=1 // pred_check
      _
    $region7: #{tpu_custom_call.1} parent=1 // pred_check_branch
      %29 = sbr.rel (0) target = $region9
    $region8: #{tpu_custom_call.1} parent=1 // pred_region
      %31 = vsyncadd [#allocation6], 0
      %s32 = sshll.u32 %s1, 4
      %s33 = int_to_ptr.hbm [resolvable:$true] %s32
      %s34 = sshll.u32 [#allocation5], 4
      %s35 = int_to_ptr.vmem [resolvable:$true] %s34
      %40 = dma.hbm_to_vmem [thread:$0]  %s33, 512, %s35, [#allocation6], 128, 128, 8
    $region9: #{tpu_custom_call.1} parent=1 // pred_fallthru
      _
    // Predicated region
    $region10: #{tpu_custom_call.1} parent=1 // pred_check
      _
    $region11: #{tpu_custom_call.1} parent=1 // pred_check_branch
      %42 = sbr.rel (0) target = $region13
    $region12: #{tpu_custom_call.1} parent=1 // pred_region
      _
    $region13: #{tpu_custom_call.1} parent=1 // pred_fallthru
      _
    // Predicated region
    $region14: #{tpu_custom_call.1} parent=1 // pred_check
      _
    $region15: #{tpu_custom_call.1} parent=1 // pred_check_branch
      %44 = sbr.rel (0) target = $region17
    $region16: #{tpu_custom_call.1} parent=1 // pred_region
      %46 = dma.done [#allocation3], 256
    $region17: #{tpu_custom_call.1} parent=1 // pred_fallthru
      _
    // Predicated region
    $region18: #{tpu_custom_call.1} parent=1 // pred_check
      _
    $region19: #{tpu_custom_call.1} parent=1 // pred_check_branch
      %48 = sbr.rel (0) target = $region21
    $region20: #{tpu_custom_call.1} parent=1 // pred_region
      %50 = dma.done [#allocation6], 512
    $region21: #{tpu_custom_call.1} parent=1 // pred_fallthru
      _
    %v51 = vld [vmem:[#allocation2] sm:$0xff]
    %v52 = vld [vmem:[#allocation2 + $0x8] sm:$0xff]
    %v53 = vld [vmem:[#allocation5] sm:$0xff]
    %v54 = vld [vmem:[#allocation5 + $0x8] sm:$0xff]
    %v55 = vld [vmem:[#allocation5 + $0x10] sm:$0xff]
    %v56 = vld [vmem:[#allocation5 + $0x18] sm:$0xff]
    %v57 = vld [vmem:[%s2] sm:$0x1]
    %v59 = vperm.slane %v57, 0
    %vm61 = vcmask 261120
    %v63 = vsel %vm61, %v51, 0
    %v66 = vsel %vm61, %v52, 0
    %68 = vmatpush.msra.mxu0 0.0
    %69 = vmatpush.msra.mxu0 0.0
    %70 = vmatpush.msra.mxu0 0.0
    %71 = vmatpush.msra.mxu0 0.0
    %72 = vmatpush.msra.mxu0 0.0
    %73 = vmatpush.msra.mxu0 0.0
    %74 = vmatpush.msra.mxu0 0.0
    %75 = vmatpush.msra.mxu0 0.0
    %76 = vmatpush.msra.mxu0 0.0
    %77 = vmatpush.msra.mxu0 0.0
    %78 = vmatpush.msra.mxu0 0.0
    %79 = vmatpush.msra.mxu0 0.0
    %80 = vmatpush.msra.mxu0 %v56
    %81 = vmatpush.msra.mxu0 %v55
    %82 = vmatpush.msra.mxu0 %v54
    %83 = vmatpush.msra.mxu0 %v53
    %84 = vmatmul.f32.gmra.mxu0 %v63
    %v85 = vpop.f32.mrf.mxu0
    %v86 = vadd.f32 %v59, %v85
    %87 = vmatmul.f32.gmra.mxu0 %v66
    %v88 = vpop.f32.mrf.mxu0
    %v89 = vadd.f32 %v59, %v88
    %90 = vdwg.mxu0
    %91 = vst.msk [vmem:[#allocation7] sm:$0xff] %vm61, %v86
    %92 = vst.msk [vmem:[#allocation7 + $0x8] sm:$0xff] %vm61, %v89
    %95 = vrot.lane.b32.xlu0 %v86, 96
    %v96 = vpop.permute.xlu0 %95
    %97 = vrot.lane.b32.xlu0 %v89, 96
    %v98 = vpop.permute.xlu0 %97
    %101 = vst.msk [vmem:[#allocation8] sm:$0xff] %vm61, %v96
    %102 = vst.msk [vmem:[#allocation8 + $0x8] sm:$0xff] %vm61, %v98
    %103 = vrot.lane.b32.xlu0 %v86, 64
    %v104 = vpop.permute.xlu0 %103
    %105 = vrot.lane.b32.xlu0 %v89, 64
    %v106 = vpop.permute.xlu0 %105
    %109 = vst.msk [vmem:[#allocation10] sm:$0xff] %vm61, %v104
    %110 = vst.msk [vmem:[#allocation10 + $0x8] sm:$0xff] %vm61, %v106
    // Predicated region
    $region22: #{tpu_custom_call.1} parent=1 // pred_check
      _
    $region23: #{tpu_custom_call.1} parent=1 // pred_check_branch
      %112 = sbr.rel (0) target = $region25
    $region24: #{tpu_custom_call.1} parent=1 // pred_region
      %114 = vsyncadd [#allocation4], 0
      %s115 = sshll.u32 [#allocation7], 4
      %s116 = int_to_ptr.vmem [resolvable:$true] %s115
      %s117 = sshll.u32 %s3, 4
      %s118 = int_to_ptr.hbm [resolvable:$true] %s117
      %123 = dma.vmem_to_hbm [thread:$0]  %s116, 256, %s118, [#allocation4], 128, 128, 8
    $region25: #{tpu_custom_call.1} parent=1 // pred_fallthru
      _
    // Predicated region
    $region26: #{tpu_custom_call.1} parent=1 // pred_check
      _
    $region27: #{tpu_custom_call.1} parent=1 // pred_check_branch
      %125 = sbr.rel (0) target = $region29
    $region28: #{tpu_custom_call.1} parent=1 // pred_region
      %127 = vsyncadd [#allocation9], 0
      %s128 = sshll.u32 [#allocation8], 4
      %s129 = int_to_ptr.vmem [resolvable:$true] %s128
      %s130 = sshll.u32 %s4, 4
      %s131 = int_to_ptr.hbm [resolvable:$true] %s130
      %136 = dma.vmem_to_hbm [thread:$0]  %s129, 256, %s131, [#allocation9], 128, 128, 8
    $region29: #{tpu_custom_call.1} parent=1 // pred_fallthru
      _
    // Predicated region
    $region30: #{tpu_custom_call.1} parent=1 // pred_check
      _
    $region31: #{tpu_custom_call.1} parent=1 // pred_check_branch
      %138 = sbr.rel (0) target = $region33
    $region32: #{tpu_custom_call.1} parent=1 // pred_region
      %140 = vsyncadd [#allocation9], 0
      %s141 = sshll.u32 [#allocation10], 4
      %s142 = int_to_ptr.vmem [resolvable:$true] %s141
      %s143 = sshll.u32 %s5, 4
      %s144 = int_to_ptr.hbm [resolvable:$true] %s143
      %149 = dma.vmem_to_hbm [thread:$0]  %s142, 256, %s144, [#allocation9], 128, 128, 8
    $region33: #{tpu_custom_call.1} parent=1 // pred_fallthru
      _
    // Predicated region
    $region34: #{tpu_custom_call.1} parent=1 // pred_check
      _
    $region35: #{tpu_custom_call.1} parent=1 // pred_check_branch
      %151 = sbr.rel (0) target = $region37
    $region36: #{tpu_custom_call.1} parent=1 // pred_region
      %153 = dma.done [#allocation4], 256
    $region37: #{tpu_custom_call.1} parent=1 // pred_fallthru
      _
    // Predicated region
    $region38: #{tpu_custom_call.1} parent=1 // pred_check
      _
    $region39: #{tpu_custom_call.1} parent=1 // pred_check_branch
      %155 = sbr.rel (0) target = $region41
    $region40: #{tpu_custom_call.1} parent=1 // pred_region
      %157 = dma.done [#allocation9], 256
    $region41: #{tpu_custom_call.1} parent=1 // pred_fallthru
      _
    // Predicated region
    $region42: #{tpu_custom_call.1} parent=1 // pred_check
      _
    $region43: #{tpu_custom_call.1} parent=1 // pred_check_branch
      %159 = sbr.rel (0) target = $region45
    $region44: #{tpu_custom_call.1} parent=1 // pred_region
      %161 = dma.done [#allocation9], 256
    $region45: #{tpu_custom_call.1} parent=1 // pred_fallthru
      _
    %162 = vsyncpa [#allocation3], 1
    %163 = vsyncpa [#allocation6], 1
    %164 = vsyncpa [#allocation4], 1
    %165 = vsyncpa [#allocation9], 1

</llo_original>
